<compile_context>
chip_gen: v6e
topology: v6e:2x2x1
jax: 0.10.0
libtpu: 0.0.40
codegen_flags: <defaults>
</compile_context>

<pallas_src>
import functools
import math

import jax
import jax.numpy as jnp
from jax.experimental import pallas as pl
from jax.experimental.pallas import tpu as pltpu


def _xlogx(v):
    return 0.0 if v <= 0.0 else float(v) * math.log(float(v))


def _round_up(x, m):
    return (x + m - 1) // m * m


def _cdiv(a, b):
    return -(-a // b)


def _label_smoothing_kernel(logits_ref, target_ref, partial_ref,
                            m_scr, se_scr, sw_scr, *,
                            confidence, smoothing_value, ignore_index,
                            plogp_const, n_classes, class_tile,
                            has_class_pad):
    k = pl.program_id(1)
    nk = pl.num_programs(1)

    @pl.when(k == 0)
    def _init():
        m_scr[...] = jnp.full_like(m_scr, -jnp.inf)
        se_scr[...] = jnp.zeros_like(se_scr)
        sw_scr[...] = jnp.zeros_like(sw_scr)

    # Stream logits in native dtype; do the math in f32.
    # TODO(synk): on v6e/v7x keep this (TM,TN) elementwise pass in bf16 (with
    # explicit f32 accumulation on the row sums) to halve vreg/VMEM pressure;
    # keep the f32 cast on v5e (no bf16 VPU/EUP).
    x = logits_ref[...].astype(jnp.float32)                     # (TM, TN)
    t = target_ref[...]                                         # (TM, 1) int32

    # Class-block offset added to the iota before comparing against target.
    col = k * class_tile + jax.lax.broadcasted_iota(jnp.int32, x.shape, 1)
    is_tgt = col == t

    if has_class_pad:
        in_range = col < n_classes
        x_safe = jnp.where(in_range, x, jnp.float32(-1e30))     # max/exp safe
        w = jnp.where(is_tgt, jnp.float32(confidence),
                      jnp.where(in_range, jnp.float32(smoothing_value),
                                jnp.float32(0.0)))
    else:
        x_safe = x
        w = jnp.where(is_tgt, jnp.float32(confidence),
                      jnp.float32(smoothing_value))

    # Online log-sum-exp across class blocks.
    m_old = m_scr[...]                                          # (TM, 1)
    m_new = jnp.maximum(m_old, jnp.max(x_safe, axis=-1, keepdims=True))
    se = (se_scr[...] * jnp.exp(m_old - m_new)
          + jnp.sum(jnp.exp(x_safe - m_new), axis=-1, keepdims=True))
    # Single weighted row sum (folds rowsum_z and the target gather); it is
    # linear in x so no rescaling is needed when the running max moves.
    # TODO(synk): on compute-bound v7x, consider offloading these row
    # reductions to the idle MXU via a ones-(TN,128) jnp.dot.
    sw = sw_scr[...] + jnp.sum(x * w, axis=-1, keepdims=True)

    m_scr[...] = m_new
    se_scr[...] = se
    sw_scr[...] = sw

    @pl.when(k == nk - 1)
    def _finalize():
        # KL(model_prob || softmax(x)) per valid row:
        #   plogp_const + logsumexp(x) - sum_j w_j * x_j
        lse = m_new + jnp.log(se)                               # (TM, 1)
        per_row = jnp.float32(plogp_const) + lse - sw
        valid = (t != jnp.int32(ignore_index)).astype(jnp.float32)
        tile_sum = jnp.sum(per_row * valid)
        # Full (8,128) block -> one unmasked full-vreg store per row tile.
        partial_ref[...] = jnp.full(partial_ref.shape, tile_sum,
                                    dtype=jnp.float32)


def label_smoothing_loss(logits, target, *, label_smoothing, n_classes,
                         ignore_index=-100, max_class_tile=2048,
                         vmem_working_budget=20 << 20):
    """logits: (B, N) float (any dtype), target: (B,) int -> scalar f32 loss."""
    assert 0.0 < label_smoothing <= 1.0
    B, N = logits.shape
    assert N == n_classes
    smoothing_value = label_smoothing / (n_classes - 1)
    confidence = 1.0 - label_smoothing
    plogp_const = _xlogx(confidence) + (n_classes - 1) * _xlogx(smoothing_value)

    itemsize = jnp.dtype(logits.dtype).itemsize

    # ---- class-axis tile (bounded VMEM even for vocab-scale N) ----
    tn = min(_round_up(max_class_tile, 128), _round_up(N, 128))
    n_pad = _round_up(N, tn)
    num_class_tiles = n_pad // tn
    has_class_pad = (n_pad != N)

    # ---- row tile, adaptive to N: working set = 2 native input buffers
    # ---- plus ~5 f32 (tm, tn) temporaries (cast, iota, exp, w, x*w). ----
    bytes_per_row = tn * (2 * itemsize + 5 * 4)
    tm = max(8, min(1024, (vmem_working_budget // bytes_per_row) // 8 * 8))
    # Keep >= 2 row tiles whenever B allows it so v7x's two TCs both get work.
    tm = min(tm, max(8, _round_up(_cdiv(B, 2), 8)))
    b_pad = _round_up(B, tm)
    num_row_tiles = b_pad // tm

    target2d = target.astype(jnp.int32).reshape(B, 1)
    if b_pad != B or n_pad != N:
        # Padded columns are masked in-kernel; padded rows carry ignore_index
        # so they contribute exactly 0.
        logits = jnp.pad(logits, ((0, b_pad - B), (0, n_pad - N)))
    if b_pad != B:
        target2d = jnp.pad(target2d, ((0, b_pad - B), (0, 0)),
                           constant_values=ignore_index)

    kernel = functools.partial(
        _label_smoothing_kernel,
        confidence=confidence,
        smoothing_value=smoothing_value,
        ignore_index=ignore_index,
        plogp_const=plogp_const,
        n_classes=N,
        class_tile=tn,
        has_class_pad=has_class_pad,
    )

    # VMEM budget: double-buffered native-dtype input tile + f32 temporaries
    # + slack; capped at 48 MiB to stay safe on v7x's 64 MiB VMEM.
    working = tm * tn * (2 * itemsize + 5 * 4)
    vmem_limit = int(max(16 << 20, min(48 << 20, working + (6 << 20))))

    # TODO(synk): on v5e (memory-bound) try pipeline_mode=pl.Buffered(3) on the
    # logits BlockSpec when the per-tile compute is short relative to the DMA.
    partials = pl.pallas_call(
        kernel,
        out_shape=jax.ShapeDtypeStruct((num_row_tiles * 8, 128), jnp.float32),
        grid_spec=pltpu.PrefetchScalarGridSpec(
            num_scalar_prefetch=0,
            grid=(num_row_tiles, num_class_tiles),
            in_specs=[
                pl.BlockSpec((tm, tn), lambda i, k: (i, k)),   # logits (native)
                pl.BlockSpec((tm, 1), lambda i, k: (i, 0)),    # targets
            ],
            out_specs=pl.BlockSpec((8, 128), lambda i, k: (i, 0)),
            scratch_shapes=[
                pltpu.VMEM((tm, 1), jnp.float32),   # running max
                pltpu.VMEM((tm, 1), jnp.float32),   # rescaled sum_exp
                pltpu.VMEM((tm, 1), jnp.float32),   # weighted logit sum
            ]),
        compiler_params=pltpu.CompilerParams(
            dimension_semantics=("parallel", "arbitrary"),
            vmem_limit_bytes=vmem_limit,
        ),
    )(logits, target2d)

    # 'batchmean': divide by the ORIGINAL batch size (ignore_index rows still
    # count in the denominator, matching F.kl_div in the PyTorch module).
    return jnp.sum(partials[0::8, 0]) / jnp.float32(B)


def _reference(logits, target, *, label_smoothing, n_classes, ignore_index=-100):
    # Pure-JAX reference mirroring the PyTorch forward.
    B, N = logits.shape
    smoothing_value = label_smoothing / (n_classes - 1)
    confidence = 1.0 - label_smoothing
    logp = jax.nn.log_softmax(logits.astype(jnp.float32), axis=-1)
    p = jnp.full((B, N), smoothing_value, dtype=jnp.float32)
    p = p.at[jnp.arange(B), target].set(confidence)
    p = jnp.where((target == ignore_index)[:, None], 0.0, p)
    safe_p = jnp.where(p > 0, p, 1.0)
    kl = jnp.where(p > 0, p * (jnp.log(safe_p) - logp), 0.0)
    return jnp.sum(kl) / B


if __name__ == "__main__":
    key = jax.random.PRNGKey(0)
    label_smoothing = 0.1
    ignore_index = -100

    # Case 1: small single-class-block path (B=8, N=128), f32.
    B, N = 8, 128
    k1, k2, key = jax.random.split(key, 3)
    logits = jax.random.normal(k1, (B, N), dtype=jnp.float32)
    target = jax.random.randint(k2, (B,), 0, N, dtype=jnp.int32)
    target = target.at[3].set(ignore_index)   # exercise masked_fill path
    loss = jax.block_until_ready(label_smoothing_loss(
        logits, target, label_smoothing=label_smoothing, n_classes=N,
        ignore_index=ignore_index))
    ref = _reference(logits, target, label_smoothing=label_smoothing,
                     n_classes=N, ignore_index=ignore_index)
    assert jnp.allclose(loss, ref, rtol=1e-5, atol=1e-5), (loss, ref)

    # Case 2: class-axis tiling + ragged-N masking + row padding (B=12, N=200).
    B, N = 12, 200
    k1, k2, key = jax.random.split(key, 3)
    logits = jax.random.normal(k1, (B, N), dtype=jnp.float32) * 3.0
    target = jax.random.randint(k2, (B,), 0, N, dtype=jnp.int32)
    target = target.at[0].set(ignore_index)
    loss = jax.block_until_ready(label_smoothing_loss(
        logits, target, label_smoothing=label_smoothing, n_classes=N,
        ignore_index=ignore_index, max_class_tile=128))
    ref = _reference(logits, target, label_smoothing=label_smoothing,
                     n_classes=N, ignore_index=ignore_index)
    assert jnp.allclose(loss, ref, rtol=1e-5, atol=1e-5), (loss, ref)

    # Case 3: bf16 logits streamed natively, 3 class blocks, 2 row tiles.
    B, N = 16, 384
    k1, k2, key = jax.random.split(key, 3)
    logits = jax.random.normal(k1, (B, N), dtype=jnp.bfloat16)
    target = jax.random.randint(k2, (B,), 0, N, dtype=jnp.int32)
    loss = jax.block_until_ready(label_smoothing_loss(
        logits, target, label_smoothing=label_smoothing, n_classes=N,
        ignore_index=ignore_index, max_class_tile=128))
    ref = _reference(logits, target, label_smoothing=label_smoothing,
                     n_classes=N, ignore_index=ignore_index)
    assert jnp.allclose(loss, ref, rtol=2e-4, atol=2e-4), (loss, ref)

    print("KERNEL_OK")
</pallas_src>

<mosaic_0001>
module attributes {stable_mosaic.version = 11 : i64} {
  func.func @_label_smoothing_kernel(%arg0: i32, %arg1: i32, %arg2: memref<8x128xf32, #tpu.memory_space<vmem>>, %arg3: memref<8x1xi32, #tpu.memory_space<vmem>>, %arg4: memref<8x128xf32, #tpu.memory_space<vmem>>, %arg5: memref<8x1xf32, #tpu.memory_space<vmem>>, %arg6: memref<8x1xf32, #tpu.memory_space<vmem>>, %arg7: memref<8x1xf32, #tpu.memory_space<vmem>>) attributes {dimension_semantics = [#tpu.dimension_semantics<parallel>, #tpu.dimension_semantics<arbitrary>], iteration_bounds = array<i64: 1, 1>, scalar_prefetch = 0 : i64, scratch_operands = 3 : i64, tpu.core_type = #tpu.core_type<tc>, window_params = [{transform_indices = @transform_0, window_bounds = array<i64: 8, 128>}, {transform_indices = @transform_1, window_bounds = array<i64: 8, 1>}, {transform_indices = @transform_2, window_bounds = array<i64: 8, 128>}]} {
    %c0_i32 = arith.constant 0 : i32
    %0 = arith.cmpi eq, %arg1, %c0_i32 : i32
    %1 = arith.extui %0 : i1 to i32
    %c0_i32_0 = arith.constant 0 : i32
    %2 = arith.cmpi ne, %1, %c0_i32_0 : i32
    scf.if %2 {
      %cst_22 = arith.constant 0xFF800000 : f32
      %39 = vector.broadcast %cst_22 : f32 to vector<8x1xf32>
      %c0_23 = arith.constant 0 : index
      %c0_24 = arith.constant 0 : index
      %40 = vector.load %arg5[%c0_23, %c0_24] : memref<8x1xf32, #tpu.memory_space<vmem>>, vector<8x1xf32>
      tpu.vector_store %arg5[%c0_23, %c0_24], %39 {strides = array<i32>} : memref<8x1xf32, #tpu.memory_space<vmem>>, vector<8x1xf32>,
      %cst_25 = arith.constant 0.000000e+00 : f32
      %41 = vector.broadcast %cst_25 : f32 to vector<8x1xf32>
      %c0_26 = arith.constant 0 : index
      %c0_27 = arith.constant 0 : index
      %42 = vector.load %arg6[%c0_26, %c0_27] : memref<8x1xf32, #tpu.memory_space<vmem>>, vector<8x1xf32>
      tpu.vector_store %arg6[%c0_26, %c0_27], %41 {strides = array<i32>} : memref<8x1xf32, #tpu.memory_space<vmem>>, vector<8x1xf32>,
      %cst_28 = arith.constant 0.000000e+00 : f32
      %43 = vector.broadcast %cst_28 : f32 to vector<8x1xf32>
      %c0_29 = arith.constant 0 : index
      %c0_30 = arith.constant 0 : index
      %44 = vector.load %arg7[%c0_29, %c0_30] : memref<8x1xf32, #tpu.memory_space<vmem>>, vector<8x1xf32>
      tpu.vector_store %arg7[%c0_29, %c0_30], %43 {strides = array<i32>} : memref<8x1xf32, #tpu.memory_space<vmem>>, vector<8x1xf32>,
    } else {
    }
    %c0 = arith.constant 0 : index
    %c0_1 = arith.constant 0 : index
    %3 = vector.load %arg2[%c0, %c0_1] : memref<8x128xf32, #tpu.memory_space<vmem>>, vector<8x128xf32>
    %c0_2 = arith.constant 0 : index
    %c0_3 = arith.constant 0 : index
    %4 = vector.load %arg3[%c0_2, %c0_3] : memref<8x1xi32, #tpu.memory_space<vmem>>, vector<8x1xi32>
    %c128_i32 = arith.constant 128 : i32
    %5 = arith.muli %arg1, %c128_i32 : i32
    %6 = tpu.iota {dimensions = array<i32: 1>} : vector<8x128xi32>
    %7 = vector.broadcast %5 : i32 to vector<8x128xi32>
    %8 = arith.addi %7, %6 : vector<8x128xi32>
    %9 = vector.broadcast %4 : vector<8x1xi32> to vector<8x128xi32>
    %10 = arith.cmpi eq, %8, %9 : vector<8x128xi32>
    %cst = arith.constant 0.899999976 : f32
    %cst_4 = arith.constant 7.87401571E-4 : f32
    %11 = vector.broadcast %cst : f32 to vector<8x128xf32>
    %12 = vector.broadcast %cst_4 : f32 to vector<8x128xf32>
    %13 = arith.select %10, %11, %12 : vector<8x128xi1>, vector<8x128xf32>
    %c0_5 = arith.constant 0 : index
    %c0_6 = arith.constant 0 : index
    %14 = vector.load %arg5[%c0_5, %c0_6] : memref<8x1xf32, #tpu.memory_space<vmem>>, vector<8x1xf32>
    %cst_7 = arith.constant dense<0xFF800000> : vector<8xf32>
    %15 = vector.multi_reduction <maximumf>, %3, %cst_7 [1] : vector<8x128xf32> to vector<8xf32>
    %16 = vector.shape_cast %15 : vector<8xf32> to vector<8x1xf32>
    %17 = arith.maximumf %14, %16 : vector<8x1xf32>
    %c0_8 = arith.constant 0 : index
    %c0_9 = arith.constant 0 : index
    %18 = vector.load %arg6[%c0_8, %c0_9] : memref<8x1xf32, #tpu.memory_space<vmem>>, vector<8x1xf32>
    %19 = arith.subf %14, %17 : vector<8x1xf32>
    %20 = math.exp %19 : vector<8x1xf32>
    %21 = arith.mulf %18, %20 : vector<8x1xf32>
    %22 = vector.broadcast %17 : vector<8x1xf32> to vector<8x128xf32>
    %23 = arith.subf %3, %22 : vector<8x128xf32>
    %24 = math.exp %23 : vector<8x128xf32>
    %cst_10 = arith.constant dense<0.000000e+00> : vector<8xf32>
    %25 = vector.multi_reduction <add>, %24, %cst_10 [1] : vector<8x128xf32> to vector<8xf32>
    %26 = vector.shape_cast %25 : vector<8xf32> to vector<8x1xf32>
    %27 = arith.addf %21, %26 : vector<8x1xf32>
    %c0_11 = arith.constant 0 : index
    %c0_12 = arith.constant 0 : index
    %28 = vector.load %arg7[%c0_11, %c0_12] : memref<8x1xf32, #tpu.memory_space<vmem>>, vector<8x1xf32>
    %29 = arith.mulf %3, %13 : vector<8x128xf32>
    %cst_13 = arith.constant dense<0.000000e+00> : vector<8xf32>
    %30 = vector.multi_reduction <add>, %29, %cst_13 [1] : vector<8x128xf32> to vector<8xf32>
    %31 = vector.shape_cast %30 : vector<8xf32> to vector<8x1xf32>
    %32 = arith.addf %28, %31 : vector<8x1xf32>
    %c0_14 = arith.constant 0 : index
    %c0_15 = arith.constant 0 : index
    %33 = vector.load %arg5[%c0_14, %c0_15] : memref<8x1xf32, #tpu.memory_space<vmem>>, vector<8x1xf32>
    tpu.vector_store %arg5[%c0_14, %c0_15], %17 {strides = array<i32>} : memref<8x1xf32, #tpu.memory_space<vmem>>, vector<8x1xf32>,
    %c0_16 = arith.constant 0 : index
    %c0_17 = arith.constant 0 : index
    %34 = vector.load %arg6[%c0_16, %c0_17] : memref<8x1xf32, #tpu.memory_space<vmem>>, vector<8x1xf32>
    tpu.vector_store %arg6[%c0_16, %c0_17], %27 {strides = array<i32>} : memref<8x1xf32, #tpu.memory_space<vmem>>, vector<8x1xf32>,
    %c0_18 = arith.constant 0 : index
    %c0_19 = arith.constant 0 : index
    %35 = vector.load %arg7[%c0_18, %c0_19] : memref<8x1xf32, #tpu.memory_space<vmem>>, vector<8x1xf32>
    tpu.vector_store %arg7[%c0_18, %c0_19], %32 {strides = array<i32>} : memref<8x1xf32, #tpu.memory_space<vmem>>, vector<8x1xf32>,
    %c0_i32_20 = arith.constant 0 : i32
    %36 = arith.cmpi eq, %arg1, %c0_i32_20 : i32
    %37 = arith.extui %36 : i1 to i32
    %c0_i32_21 = arith.constant 0 : i32
    %38 = arith.cmpi ne, %37, %c0_i32_21 : i32
    scf.if %38 {
      %39 = math.log %27 : vector<8x1xf32>
      %40 = arith.addf %17, %39 : vector<8x1xf32>
      %cst_22 = arith.constant -0.809501707 : f32
      %41 = vector.broadcast %cst_22 : f32 to vector<8x1xf32>
      %42 = arith.addf %41, %40 : vector<8x1xf32>
      %43 = arith.subf %42, %32 : vector<8x1xf32>
      %c-100_i32 = arith.constant -100 : i32
      %44 = vector.broadcast %c-100_i32 : i32 to vector<8x1xi32>
      %45 = arith.cmpi ne, %4, %44 : vector<8x1xi32>
      %46 = arith.extui %45 : vector<8x1xi1> to vector<8x1xi32>
      %47 = arith.sitofp %46 : vector<8x1xi32> to vector<8x1xf32>
      %48 = arith.mulf %43, %47 : vector<8x1xf32>
      %49 = vector.shape_cast %48 : vector<8x1xf32> to vector<1x8x1xf32>
      %cst_23 = arith.constant dense<0.000000e+00> : vector<1xf32>
      %50 = vector.multi_reduction <add>, %49, %cst_23 [1, 2] : vector<1x8x1xf32> to vector<1xf32>
      %51 = vector.shape_cast %50 : vector<1xf32> to vector<1x1x1xf32>
      %52 = vector.extract %51[0, 0, 0] : f32 from vector<1x1x1xf32>
      %53 = vector.broadcast %52 : f32 to vector<8x128xf32>
      %c0_24 = arith.constant 0 : index
      %c0_25 = arith.constant 0 : index
      %54 = vector.load %arg4[%c0_24, %c0_25] : memref<8x128xf32, #tpu.memory_space<vmem>>, vector<8x128xf32>
      tpu.vector_store %arg4[%c0_24, %c0_25], %53 {strides = array<i32>} : memref<8x128xf32, #tpu.memory_space<vmem>>, vector<8x128xf32>,
    } else {
    }
    return
  }
  func.func @transform_0(%arg0: i32, %arg1: i32) -> (i32, i32) {
    %c0_i32 = arith.constant 0 : i32
    return %arg0, %arg1 : i32, i32
  }
  func.func @transform_1(%arg0: i32, %arg1: i32) -> (i32, i32) {
    %c0_i32 = arith.constant 0 : i32
    %c0_i32_0 = arith.constant 0 : i32
    return %arg0, %c0_i32 : i32, i32
  }
  func.func @transform_2(%arg0: i32, %arg1: i32) -> (i32, i32) {
    %c0_i32 = arith.constant 0 : i32
    %c0_i32_0 = arith.constant 0 : i32
    return %arg0, %c0_i32 : i32, i32
  }
}

</mosaic_0001>

<llo_original>
// kernel: tpu_custom_call.1
$region0: #{tpu_custom_call.1}
  #allocation0 [shape = 'u32[]', space=smem, size = 0x4, offset = 0x4, fixed_abs, tag = 'smem constant byte address 0x4 - core index']
  #allocation1 [shape = 'u32[144,128]{1,0:T(1,128)}', space=vmem, size = 0x12000, scoped, tag = 'internal scratch']
  #allocation2 [shape = 'f32[8,1]{1,0:T(8,128)}', space=vmem, size = 0x1000, scoped, tag = 'scratch operand']
  #allocation3 [shape = 'f32[8,1]{1,0:T(8,128)}', space=vmem, size = 0x1000, scoped, tag = 'scratch operand']
  #allocation4 [shape = 'f32[8,1]{1,0:T(8,128)}', space=vmem, size = 0x1000, scoped, tag = 'scratch operand']
  %s0 = inlined_call_operand.vmem [shape: f32[8,128], index: 0, kind: input, shape index: {}]
  %s1 = inlined_call_operand.vmem [shape: s32[8,1], index: 1, kind: input, shape index: {}]
  %s2 = inlined_call_operand.hbm [shape: f32[8,128], index: 2, kind: output, shape index: {}]
  %s3 = sld [smem:[#allocation0]]
  $region26: #{tpu_custom_call.1} parent=0
    _
  %s5 = ssub.s32 1, %s3
  %s6 = scalar_select 0, %s5, %s3
  $region1: #{tpu_custom_call.1} parent=0
    #allocation5 [shape = 'u8[4096]{0}', space=vmem, size = 0x1000, scoped, tag = 'output window, operand 0, single buffered']
    #allocation6 [shape = 's32[1]{0}', space=sflag, size = 0x4, scoped, tag = 'scoped memory for tpu_custom_call.1']
    %7 = vsyncpa [#allocation6], 0
    // Predicated region
    $region2: #{tpu_custom_call.1} parent=1 // pred_check
      _
    $region3: #{tpu_custom_call.1} parent=1 // pred_check_branch
      %9 = sbr.rel (0) target = $region5
    $region4: #{tpu_custom_call.1} parent=1 // pred_region
      _
    $region5: #{tpu_custom_call.1} parent=1 // pred_fallthru
      _
    // Predicated region
    $region6: #{tpu_custom_call.1} parent=1 // pred_check
      _
    $region7: #{tpu_custom_call.1} parent=1 // pred_check_branch
      %11 = sbr.rel (0) target = $region9
    $region8: #{tpu_custom_call.1} parent=1 // pred_region
      _
    $region9: #{tpu_custom_call.1} parent=1 // pred_fallthru
      _
    %p12 = scmp.eq.s32.totalorder 0, 0
    // Predicated region
    $region10: #{tpu_custom_call.1} parent=1 // pred_check
      %p13 = pneg %p12
    $region11: #{tpu_custom_call.1} parent=1 // pred_check_branch
      %15 = sbr.rel (%p13) target = $region13
    $region12: #{tpu_custom_call.1} parent=1 // pred_region
      %vm16 = vcmask 7168
      %17 = vst.msk [vmem:[#allocation2] sm:$0xff] %vm16, -inf
      %18 = vst.msk [vmem:[#allocation3] sm:$0xff] %vm16, 0.0
      %19 = vst.msk [vmem:[#allocation4] sm:$0xff] %vm16, 0.0
    $region13: #{tpu_custom_call.1} parent=1 // pred_fallthru
      _
    %v20 = vld [vmem:[%s0] sm:$0xff]
    %v21 = vld [vmem:[%s1] sm:$0xff]
    %s22 = smul.u32 0, 128
    %v23 = vlaneseq
    %v24 = vand.u32 %v23, 127
    %v25 = vstv %s22
    %v26 = vadd.s32 %v25, %v24
    %27 = vset.pattern.permute.xlu0 0
    %28 = vperm.xlu0 %27, %v21
    %v29 = vpop.permute.xlu0 %28
    %vm30 = vcmp.eq.s32.totalorder %v26, %v29
    %v31 = vsel %vm30, 0.9, 0.0007874016
    %v32 = vld [vmem:[#allocation2] sm:$0xff]
    %33 = vmax.xlane.f32.xlu0 %v20
    %v34 = vpop.xlane.xlu0 %33
    %v35 = vmax.f32 %v32, %v34
    %v36 = vld [vmem:[#allocation3] sm:$0xff]
    %v37 = vsub.f32 %v32, %v35
    %v38 = vmul.f32 %v37, 1.442695
    %v39 = vpow.pop %v38
    %v40 = vmul.f32 %v36, %v39
    %42 = vset.pattern.permute.xlu0 0
    %43 = vperm.xlu0 %42, %v35
    %v44 = vpop.permute.xlu0 %43
    %v46 = vsub.f32 %v20, %v44
    %v47 = vmul.f32 %v46, 1.442695
    %v48 = vpow.pop %v47
    %49 = vadd.xlane.f32.xlu0 %v48
    %v50 = vpop.xlane.xlu0 %49
    %v51 = vadd.f32 %v40, %v50
    %v52 = vld [vmem:[#allocation4] sm:$0xff]
    %v53 = vmul.f32 %v20, %v31
    %54 = vadd.xlane.f32.xlu0 %v53
    %v55 = vpop.xlane.xlu0 %54
    %v56 = vadd.f32 %v52, %v55
    %vm57 = vcmask 7168
    %58 = vst.msk [vmem:[#allocation2] sm:$0xff] %vm57, %v35
    %59 = vst.msk [vmem:[#allocation3] sm:$0xff] %vm57, %v51
    %60 = vst.msk [vmem:[#allocation4] sm:$0xff] %vm57, %v56
    // Predicated region
    $region14: #{tpu_custom_call.1} parent=1 // pred_check
      %p61 = pneg %p12
    $region15: #{tpu_custom_call.1} parent=1 // pred_check_branch
      %63 = sbr.rel (%p61) target = $region17
    $region16: #{tpu_custom_call.1} parent=1 // pred_region
      %v64 = vlog2.pop %v51
      %v65 = vmul.f32 %v64, 0.6931472
      %v66 = vadd.f32 %v35, %v65
      %v67 = vadd.f32 %v66, -0.8095017
      %v68 = vsub.f32 %v67, %v56
      %vm69 = vcmp.ne.s32.totalorder %v21, 4294967196
      %v70 = vsel %vm69, 1, 0
      %v71 = vcvt.s32.f32 %v70
      %v72 = vmul.f32 %v68, %v71
      %v73 = vsel %vm57, %v72, 0.0
      %74 = vadd.xlane.f32.xlu0 %v73
      %v75 = vpop.xlane.xlu0 %74
      %v76 = vrot.slane %v75, 4
      %v77 = vadd.f32 %v75, %v76
      %v78 = vrot.slane %v77, 2
      %v79 = vadd.f32 %v77, %v78
      %v80 = vrot.slane %v79, 1
      %v81 = vadd.f32 %v79, %v80
      %s82 = vtos %v81
      %v83 = vstv %s82
      %84 = vst [vmem:[#allocation5] sm:$0xff] %v83
    $region17: #{tpu_custom_call.1} parent=1 // pred_fallthru
      _
    // Predicated region
    $region18: #{tpu_custom_call.1} parent=1 // pred_check
      _
    $region19: #{tpu_custom_call.1} parent=1 // pred_check_branch
      %86 = sbr.rel (0) target = $region21
    $region20: #{tpu_custom_call.1} parent=1 // pred_region
      %s88 = ssub.s32 128, 128
      %89 = vsyncadd [#allocation6], %s88
      %s91 = sshll.u32 [#allocation5], 4
      %s92 = int_to_ptr.vmem [resolvable:$true] %s91
      %94 = dma.vmem_to_hbm [thread:$0]  %s92, 128, %s2, [#allocation6]
    $region21: #{tpu_custom_call.1} parent=1 // pred_fallthru
      _
    // Predicated region
    $region22: #{tpu_custom_call.1} parent=1 // pred_check
      _
    $region23: #{tpu_custom_call.1} parent=1 // pred_check_branch
      %96 = sbr.rel (0) target = $region25
    $region24: #{tpu_custom_call.1} parent=1 // pred_region
      %97 = dma.done [#allocation6], 128
    $region25: #{tpu_custom_call.1} parent=1 // pred_fallthru
      _
    %98 = vsyncpa [#allocation6], 1

</llo_original>
